<compile_context>
chip_gen: v5e
topology: v5e:2x2
jax: 0.10.0
libtpu: 0.0.40
codegen_flags: <defaults>
</compile_context>

<pallas_src>
import functools

import jax
import jax.numpy as jnp
from jax.experimental import pallas as pl
from jax.experimental.pallas import tpu as pltpu


def _round_up(x, m):
    return ((x + m - 1) // m) * m


def _ece_bin_kernel(logits_ref, labels_ref, out_ref, acc_ref, *, n_valid,
                    n_bins, tile_n, tiles_per_slab, tiles_total):
    slab = pl.program_id(0)   # per-TensorCore accumulator slab ("parallel")
    j = pl.program_id(1)      # row tiles within the slab ("arbitrary")

    @pl.when(j == 0)
    def _():
        acc_ref[...] = jnp.zeros_like(acc_ref)

    logits = logits_ref[...]                               # (tile_n, C), input dtype
    labels = labels_ref[...].astype(jnp.int32)             # (tile_n, 1)
    num_classes = logits.shape[-1]

    # softmax confidence: max prob == 1 / sum(exp(x - max)).  Keep the
    # full-width max/subtract in the incoming dtype (bf16 VALU on v6e/v7x);
    # exp + sum accumulate in f32.
    row_max = jnp.max(logits, axis=-1, keepdims=True)                # (tile_n, 1)
    shifted = (logits - row_max).astype(jnp.float32)                 # (tile_n, C)
    sum_exp = jnp.sum(jnp.exp(shifted), axis=-1, keepdims=True)      # (tile_n, 1)
    conf = pl.reciprocal(sum_exp, approx=False)                      # (tile_n, 1) f32

    # argmax with first-index tie-breaking (matches torch.max).  Kept as the
    # explicit compare/iota/min form (guaranteed to lower in Mosaic).
    # TODO(synk): switch to jnp.argmax(..., keepdims=True) once its Mosaic
    # lowering is validated; it would save ~2 data-wide passes.
    cls_iota = jax.lax.broadcasted_iota(jnp.int32, logits.shape, 1)  # (tile_n, C)
    pred = jnp.min(
        jnp.where(logits == row_max, cls_iota, num_classes), axis=-1, keepdims=True
    )                                                                # (tile_n, 1)
    correct = pred == labels                                         # (tile_n, 1) bool

    # Ragged-tail / duplicate-tile masking.  The last block of the grid may
    # extend past N (stale VMEM rows), and when tiles_total does not divide
    # evenly across slabs the clamped index_map re-reads the last real tile;
    # both cases are killed here.  Masking MUST be select-based: tail rows can
    # hold NaN/Inf and 0*NaN = NaN would poison the MXU contraction.
    tile_idx = slab * tiles_per_slab + j
    row_start = jnp.minimum(tile_idx, tiles_total - 1) * tile_n      # matches index_map
    row_idx = jax.lax.broadcasted_iota(jnp.int32, (tile_n, 1), 0) + row_start
    valid = (row_idx < n_valid) & (tile_idx < tiles_total)           # (tile_n, 1) bool

    one = jnp.float32(1.0)
    zero = jnp.float32(0.0)
    valid_f = jnp.where(valid, one, zero)
    conf_m = jnp.where(valid, conf, zero)            # NaN-safe (select, not multiply)
    acc_m = jnp.where(valid & correct, one, zero)

    # Uniform bins: bin = clip(ceil(conf*n_bins) - 1, 0, n_bins-1).
    # Matches the (lower, upper] semantics of the torch loop since conf > 0.
    # Computed from the masked confidence so no NaN reaches the int cast.
    bin_idx = jnp.clip(
        jnp.ceil(conf_m * jnp.float32(n_bins)).astype(jnp.int32) - 1, 0, n_bins - 1
    )                                                                # (tile_n, 1)
    bin_iota = jax.lax.broadcasted_iota(jnp.int32, (tile_n, n_bins), 1)
    in_bin = (bin_iota == bin_idx).astype(jnp.float32)               # (tile_n, n_bins)

    # stats columns: [valid, conf, acc]  -> (tile_n, 3)
    col = jax.lax.broadcasted_iota(jnp.int32, (tile_n, 3), 1)
    stats = jnp.where(col == 0, valid_f, jnp.where(col == 1, conf_m, acc_m))

    # Per-bin reduction as a single MXU contraction over the row axis,
    # accumulated into a VMEM scratch (no lane-sparse output RMW per step).
    contrib = jax.lax.dot_general(
        stats, in_bin,
        dimension_numbers=(((0,), (0,)), ((), ())),
        preferred_element_type=jnp.float32,
    )                                                                # (3, n_bins)
    acc_ref[...] += contrib

    @pl.when(j == tiles_per_slab - 1)
    def _():
        out_ref[0] = acc_ref[...]


def _vmem_capacity_bytes():
    try:
        info = pltpu.get_tpu_info()
        return int(getattr(info, "vmem_capacity_bytes", 64 * 1024 * 1024))
    except Exception:
        return 64 * 1024 * 1024  # conservative (v7x per-TC VMEM)


def _num_tensorcores():
    """Best-effort TensorCores-per-chip (2 on v7x, 1 on v5e/v6e)."""
    try:
        info = pltpu.get_tpu_info()
        for attr in ("num_tensorcores", "tensorcores_per_chip", "num_cores"):
            v = getattr(info, attr, None)
            if isinstance(v, int) and v > 0:
                return min(v, 2)
    except Exception:
        pass
    try:
        kind = jax.devices()[0].device_kind.lower()
        if "v7" in kind:
            return 2
    except Exception:
        pass
    return 1


def _sublane_multiple(itemsize):
    # packed-sublane multiple: f32 -> 8, bf16 -> 16, int8/fp8 -> 32
    return max(8, 32 // max(itemsize, 1))


def _pick_tile_n(n, c, itemsize):
    """Row tile sized for ~2 MiB of logits per step, clamped by VMEM."""
    vmem_cap = _vmem_capacity_bytes()
    budget = int(vmem_cap * 0.35)
    # Per-row VMEM estimate:
    #   * double-buffered DMA blocks: logits row (c*itemsize) + labels row
    #     ((tile_n,1) pads to 128 lanes -> 512 B)
    #   * data-wide working set over C: shifted (input dtype) + exp/f32 pass
    #   * ~10 lane-padded (tile_n,1)/(tile_n,3)/(tile_n,n_bins) f32 temporaries
    #     (each pads to 128 lanes -> 512 B/row)
    per_row = 2 * (c * itemsize + 512) + (itemsize + 8) * c + 10 * 512
    vmem_rows = budget // max(per_row, 1)
    # ~2 MiB of logits per grid step is enough to sit on the HBM roofline.
    target_rows = -(-(2 * 1024 * 1024) // max(c * itemsize, 1))
    sub = _sublane_multiple(itemsize)
    tile = min(vmem_rows, max(target_rows, 256))
    tile = max(sub, (tile // sub) * sub)
    tile = min(tile, _round_up(n, sub))  # never tile beyond the row count
    return tile, vmem_cap


def ece_bin_stats(logits, labels, n_bins=15, tile_n=None, num_slabs=None):
    """Returns per-bin (count, sum_confidence, sum_accuracy) as a (3, n_bins) array."""
    n, c = logits.shape
    # Stream logits in their incoming dtype (bf16 OK); no padded HBM copy.
    labels2d = labels.reshape(n, 1).astype(jnp.int32)

    itemsize = jnp.dtype(logits.dtype).itemsize
    sub = _sublane_multiple(itemsize)
    auto_tile, vmem_cap = _pick_tile_n(n, c, itemsize)
    if tile_n is None:
        tile_n = auto_tile
    tile_n = max(sub, (min(tile_n, _round_up(n, sub)) // sub) * sub)

    tiles_total = pl.cdiv(n, tile_n)
    if num_slabs is None:
        # One accumulator slab per TensorCore: 2 on v7x megacore, 1 on v5e/v6e
        # (avoids a useless extra zero/writeback pass on single-core chips).
        num_slabs = _num_tensorcores()
    num_slabs = max(1, min(num_slabs, tiles_total))
    tiles_per_slab = pl.cdiv(tiles_total, num_slabs)

    # TODO(synk): for vocab-scale C (32K-128K) add a class-tile grid axis with
    # an online (flash-softmax style) running max / sum-exp / first-index
    # argmax so the per-step block is (tile_n, tile_c) instead of (tile_n, C)
    # — required to keep large row tiles inside 64 MiB VMEM on v7x.
    # TODO(synk): consider pipeline_mode=pl.Buffered(3) on the logits spec and
    # pltpu.CORE_PARALLEL on the slab axis once validated on v7x hardware.

    kernel = functools.partial(
        _ece_bin_kernel,
        n_valid=n, n_bins=n_bins, tile_n=tile_n,
        tiles_per_slab=tiles_per_slab, tiles_total=tiles_total,
    )

    def row_map(s, j):
        # Clamp so a slab's trailing (empty) tiles never request an
        # out-of-bounds block; the kernel masks the duplicate re-read.
        return (jnp.minimum(s * tiles_per_slab + j, tiles_total - 1), 0)

    slab_stats = pl.pallas_call(
        kernel,
        out_shape=jax.ShapeDtypeStruct((num_slabs, 3, n_bins), jnp.float32),
        grid_spec=pltpu.PrefetchScalarGridSpec(
            num_scalar_prefetch=0,
            grid=(num_slabs, tiles_per_slab),
            in_specs=[
                pl.BlockSpec((tile_n, c), row_map),
                pl.BlockSpec((tile_n, 1), row_map),
            ],
            out_specs=pl.BlockSpec((1, 3, n_bins), lambda s, j: (s, 0, 0)),
            scratch_shapes=[pltpu.VMEM((3, n_bins), jnp.float32)],
        ),
        compiler_params=pltpu.CompilerParams(
            dimension_semantics=("parallel", "arbitrary"),
            vmem_limit_bytes=int(vmem_cap * 0.7),
        ),
    )(logits, labels2d)

    return jnp.sum(slab_stats, axis=0)  # (3, n_bins)


def ece_loss(logits, labels, n_bins=15, tile_n=None):
    """Device-side ECE.

    Returns (ece[1], avg_conf[n_bins], avg_acc[n_bins], nonempty[n_bins]) as
    JAX arrays (no host sync, safe to call inside a larger jit/step).
    """
    n = logits.shape[0]
    stats = ece_bin_stats(logits, labels, n_bins=n_bins, tile_n=tile_n)
    counts, conf_sums, acc_sums = stats[0], stats[1], stats[2]

    nonempty = counts > 0
    safe_counts = jnp.maximum(counts, 1.0)
    avg_conf = jnp.where(nonempty, conf_sums / safe_counts, 0.0)
    avg_acc = jnp.where(nonempty, acc_sums / safe_counts, 0.0)
    prop = counts / jnp.float32(n)
    ece = jnp.sum(
        jnp.where(nonempty, jnp.abs(avg_conf - avg_acc) * prop, 0.0)
    ).reshape(1)
    return ece, avg_conf, avg_acc, nonempty


def ece_loss_with_lists(logits, labels, n_bins=15, tile_n=None):
    """Mirror of _ECELoss.forward: (ece, PROB, ACCU) with Python lists.

    Only call this when Python floats are actually needed — it forces a host
    sync; otherwise use `ece_loss` and keep everything on device.
    """
    ece, avg_conf, avg_acc, nonempty = ece_loss(logits, labels, n_bins, tile_n)
    ne, pc, pa = jax.device_get((nonempty, avg_conf, avg_acc))
    prob = [float(p) for p, m in zip(pc, ne) if m]
    accu = [float(a) for a, m in zip(pa, ne) if m]
    return ece, prob, accu


if __name__ == "__main__":
    key = jax.random.PRNGKey(0)
    k1, k2 = jax.random.split(key)

    batch = 8
    num_classes = 32

    logits = jax.random.normal(k1, (batch, num_classes), dtype=jnp.float32) * 3.0
    labels = jax.random.randint(k2, (batch,), 0, num_classes, dtype=jnp.int32)

    ece, prob, accu = ece_loss_with_lists(logits, labels, n_bins=15)
    jax.block_until_ready(ece)

    # sanity check against a pure-JAX reference (faithful to the torch module)
    sm = jax.nn.softmax(logits, axis=1)
    conf_ref = jnp.max(sm, axis=1)
    pred_ref = jnp.argmax(sm, axis=1)
    acc_ref = (pred_ref == labels).astype(jnp.float32)
    bounds = jnp.linspace(0.0, 1.0, 16)
    ece_ref = 0.0
    for lo, up in zip(bounds[:-1], bounds[1:]):
        in_bin = (conf_ref > lo) & (conf_ref <= up)
        prop_in_bin = jnp.mean(in_bin.astype(jnp.float32))
        if float(prop_in_bin) > 0:
            a = jnp.mean(jnp.where(in_bin, acc_ref, 0.0)) / prop_in_bin
            c = jnp.mean(jnp.where(in_bin, conf_ref, 0.0)) / prop_in_bin
            ece_ref += jnp.abs(c - a) * prop_in_bin
    assert abs(float(ece[0]) - float(ece_ref)) < 1e-5, (float(ece[0]), float(ece_ref))
    assert len(prob) == len(accu)

    print("KERNEL_OK")
</pallas_src>

<mosaic_0001>
module attributes {stable_mosaic.version = 11 : i64} {
  func.func @_ece_bin_kernel(%arg0: i32, %arg1: i32, %arg2: memref<8x32xf32, #tpu.memory_space<vmem>>, %arg3: memref<8x1xi32, #tpu.memory_space<vmem>>, %arg4: memref<1x3x15xf32, #tpu.memory_space<vmem>>, %arg5: memref<3x15xf32, #tpu.memory_space<vmem>>) attributes {dimension_semantics = [#tpu.dimension_semantics<parallel>, #tpu.dimension_semantics<arbitrary>], iteration_bounds = array<i64: 1, 1>, scalar_prefetch = 0 : i64, scratch_operands = 1 : i64, tpu.core_type = #tpu.core_type<tc>, window_params = [{transform_indices = @transform_0, window_bounds = array<i64: 8, 32>}, {transform_indices = @transform_1, window_bounds = array<i64: 8, 1>}, {transform_indices = @transform_2, window_bounds = array<i64: 1, 3, 15>}]} {
    %c0_i32 = arith.constant 0 : i32
    %0 = arith.cmpi eq, %arg1, %c0_i32 : i32
    %1 = arith.extui %0 : i1 to i32
    %c0_i32_0 = arith.constant 0 : i32
    %2 = arith.cmpi ne, %1, %c0_i32_0 : i32
    scf.if %2 {
      %cst_26 = arith.constant 0.000000e+00 : f32
      %77 = vector.broadcast %cst_26 : f32 to vector<3x15xf32>
      %c0_27 = arith.constant 0 : index
      %c0_28 = arith.constant 0 : index
      %78 = vector.load %arg5[%c0_27, %c0_28] : memref<3x15xf32, #tpu.memory_space<vmem>>, vector<3x15xf32>
      tpu.vector_store %arg5[%c0_27, %c0_28], %77 {strides = array<i32>} : memref<3x15xf32, #tpu.memory_space<vmem>>, vector<3x15xf32>,
    } else {
    }
    %c0 = arith.constant 0 : index
    %c0_1 = arith.constant 0 : index
    %3 = vector.load %arg2[%c0, %c0_1] : memref<8x32xf32, #tpu.memory_space<vmem>>, vector<8x32xf32>
    %c0_2 = arith.constant 0 : index
    %c0_3 = arith.constant 0 : index
    %4 = vector.load %arg3[%c0_2, %c0_3] : memref<8x1xi32, #tpu.memory_space<vmem>>, vector<8x1xi32>
    %cst = arith.constant dense<0xFF800000> : vector<8xf32>
    %5 = vector.multi_reduction <maximumf>, %3, %cst [1] : vector<8x32xf32> to vector<8xf32>
    %6 = vector.shape_cast %5 : vector<8xf32> to vector<8x1xf32>
    %7 = vector.broadcast %6 : vector<8x1xf32> to vector<8x32xf32>
    %8 = arith.subf %3, %7 : vector<8x32xf32>
    %9 = math.exp %8 : vector<8x32xf32>
    %cst_4 = arith.constant dense<0.000000e+00> : vector<8xf32>
    %10 = vector.multi_reduction <add>, %9, %cst_4 [1] : vector<8x32xf32> to vector<8xf32>
    %11 = vector.shape_cast %10 : vector<8xf32> to vector<8x1xf32>
    %12 = tpu.reciprocal %11 : vector<8x1xf32> -> vector<8x1xf32>
    %13 = tpu.iota {dimensions = array<i32: 1>} : vector<8x32xi32>
    %14 = vector.broadcast %6 : vector<8x1xf32> to vector<8x32xf32>
    %15 = arith.cmpf oeq, %3, %14 : vector<8x32xf32>
    %c32_i32 = arith.constant 32 : i32
    %16 = vector.broadcast %c32_i32 : i32 to vector<8x32xi32>
    %17 = arith.select %15, %13, %16 : vector<8x32xi1>, vector<8x32xi32>
    %cst_5 = arith.constant dense<2147483647> : vector<8xi32>
    %18 = vector.multi_reduction <minsi>, %17, %cst_5 [1] : vector<8x32xi32> to vector<8xi32>
    %19 = vector.shape_cast %18 : vector<8xi32> to vector<8x1xi32>
    %20 = arith.cmpi eq, %19, %4 : vector<8x1xi32>
    %c1_i32 = arith.constant 1 : i32
    %21 = arith.muli %arg0, %c1_i32 : i32
    %22 = arith.addi %21, %arg1 : i32
    %c0_i32_6 = arith.constant 0 : i32
    %23 = arith.minsi %22, %c0_i32_6 : i32
    %c8_i32 = arith.constant 8 : i32
    %24 = arith.muli %23, %c8_i32 : i32
    %25 = tpu.iota {dimensions = array<i32: 0>} : vector<8x1xi32>
    %26 = vector.broadcast %24 : i32 to vector<8x1xi32>
    %27 = arith.addi %25, %26 : vector<8x1xi32>
    %c8_i32_7 = arith.constant 8 : i32
    %28 = vector.broadcast %c8_i32_7 : i32 to vector<8x1xi32>
    %29 = arith.cmpi slt, %27, %28 : vector<8x1xi32>
    %c1_i32_8 = arith.constant 1 : i32
    %30 = arith.cmpi slt, %22, %c1_i32_8 : i32
    %31 = vector.broadcast %30 : i1 to vector<8x1xi1>
    %32 = arith.andi %29, %31 : vector<8x1xi1>
    %cst_9 = arith.constant 1.000000e+00 : f32
    %cst_10 = arith.constant 0.000000e+00 : f32
    %33 = vector.broadcast %cst_9 : f32 to vector<8x1xf32>
    %34 = vector.broadcast %cst_10 : f32 to vector<8x1xf32>
    %35 = arith.select %32, %33, %34 : vector<8x1xi1>, vector<8x1xf32>
    %cst_11 = arith.constant 0.000000e+00 : f32
    %36 = vector.broadcast %cst_11 : f32 to vector<8x1xf32>
    %37 = arith.select %32, %12, %36 : vector<8x1xi1>, vector<8x1xf32>
    %38 = arith.andi %32, %20 : vector<8x1xi1>
    %cst_12 = arith.constant 1.000000e+00 : f32
    %cst_13 = arith.constant 0.000000e+00 : f32
    %39 = vector.broadcast %cst_12 : f32 to vector<8x1xf32>
    %40 = vector.broadcast %cst_13 : f32 to vector<8x1xf32>
    %41 = arith.select %38, %39, %40 : vector<8x1xi1>, vector<8x1xf32>
    %cst_14 = arith.constant 1.500000e+01 : f32
    %42 = vector.broadcast %cst_14 : f32 to vector<8x1xf32>
    %43 = arith.mulf %37, %42 : vector<8x1xf32>
    %44 = math.ceil %43 : vector<8x1xf32>
    %45 = arith.fptosi %44 : vector<8x1xf32> to vector<8x1xi32>
    %c1_i32_15 = arith.constant 1 : i32
    %46 = vector.broadcast %c1_i32_15 : i32 to vector<8x1xi32>
    %47 = arith.subi %45, %46 : vector<8x1xi32>
    %c0_i32_16 = arith.constant 0 : i32
    %c14_i32 = arith.constant 14 : i32
    %48 = vector.broadcast %c0_i32_16 : i32 to vector<8x1xi32>
    %49 = arith.maxsi %48, %47 : vector<8x1xi32>
    %50 = vector.broadcast %c14_i32 : i32 to vector<8x1xi32>
    %51 = arith.minsi %50, %49 : vector<8x1xi32>
    %52 = tpu.iota {dimensions = array<i32: 1>} : vector<8x15xi32>
    %53 = vector.broadcast %51 : vector<8x1xi32> to vector<8x15xi32>
    %54 = arith.cmpi eq, %52, %53 : vector<8x15xi32>
    %55 = arith.extui %54 : vector<8x15xi1> to vector<8x15xi32>
    %56 = arith.sitofp %55 : vector<8x15xi32> to vector<8x15xf32>
    %57 = tpu.iota {dimensions = array<i32: 1>} : vector<8x3xi32>
    %c0_i32_17 = arith.constant 0 : i32
    %58 = vector.broadcast %c0_i32_17 : i32 to vector<8x3xi32>
    %59 = arith.cmpi eq, %57, %58 : vector<8x3xi32>
    %c1_i32_18 = arith.constant 1 : i32
    %60 = vector.broadcast %c1_i32_18 : i32 to vector<8x3xi32>
    %61 = arith.cmpi eq, %57, %60 : vector<8x3xi32>
    %62 = vector.shape_cast %37 : vector<8x1xf32> to vector<8x1xf32>
    %63 = vector.broadcast %62 : vector<8x1xf32> to vector<8x3xf32>
    %64 = vector.shape_cast %41 : vector<8x1xf32> to vector<8x1xf32>
    %65 = vector.broadcast %64 : vector<8x1xf32> to vector<8x3xf32>
    %66 = arith.select %61, %63, %65 : vector<8x3xi1>, vector<8x3xf32>
    %67 = vector.shape_cast %35 : vector<8x1xf32> to vector<8x1xf32>
    %68 = vector.broadcast %67 : vector<8x1xf32> to vector<8x3xf32>
    %69 = arith.select %59, %68, %66 : vector<8x3xi1>, vector<8x3xf32>
    %cst_19 = arith.constant dense<0.000000e+00> : vector<3x15xf32>
    %70 = tpu.matmul %69, %56, %cst_19 {dimension_numbers = #tpu.dot_dimension_numbers<[0], [0], [1], [1], [0, 1, 1, 1], [], []>} : vector<8x3xf32>, vector<8x15xf32>, vector<3x15xf32> -> vector<3x15xf32>
    %c0_20 = arith.constant 0 : index
    %c0_21 = arith.constant 0 : index
    %71 = vector.load %arg5[%c0_20, %c0_21] : memref<3x15xf32, #tpu.memory_space<vmem>>, vector<3x15xf32>
    %72 = arith.addf %71, %70 : vector<3x15xf32>
    %c0_22 = arith.constant 0 : index
    %c0_23 = arith.constant 0 : index
    %73 = vector.load %arg5[%c0_22, %c0_23] : memref<3x15xf32, #tpu.memory_space<vmem>>, vector<3x15xf32>
    tpu.vector_store %arg5[%c0_22, %c0_23], %72 {strides = array<i32>} : memref<3x15xf32, #tpu.memory_space<vmem>>, vector<3x15xf32>,
    %c0_i32_24 = arith.constant 0 : i32
    %74 = arith.cmpi eq, %arg1, %c0_i32_24 : i32
    %75 = arith.extui %74 : i1 to i32
    %c0_i32_25 = arith.constant 0 : i32
    %76 = arith.cmpi ne, %75, %c0_i32_25 : i32
    scf.if %76 {
      %c0_26 = arith.constant 0 : index
      %c0_27 = arith.constant 0 : index
      %77 = vector.load %arg5[%c0_26, %c0_27] : memref<3x15xf32, #tpu.memory_space<vmem>>, vector<3x15xf32>
      %c0_28 = arith.constant 0 : index
      %c0_29 = arith.constant 0 : index
      %c0_30 = arith.constant 0 : index
      %78 = vector.load %arg4[%c0_28, %c0_29, %c0_30] : memref<1x3x15xf32, #tpu.memory_space<vmem>>, vector<1x3x15xf32>
      %79 = vector.shape_cast %78 : vector<1x3x15xf32> to vector<3x15xf32>
      %80 = vector.shape_cast %77 : vector<3x15xf32> to vector<1x3x15xf32>
      tpu.vector_store %arg4[%c0_28, %c0_29, %c0_30], %80 {strides = array<i32>} : memref<1x3x15xf32, #tpu.memory_space<vmem>>, vector<1x3x15xf32>,
    } else {
    }
    return
  }
  func.func @transform_0(%arg0: i32, %arg1: i32) -> (i32, i32) {
    %c1_i32 = arith.constant 1 : i32
    %0 = arith.muli %arg0, %c1_i32 : i32
    %1 = arith.addi %0, %arg1 : i32
    %c0_i32 = arith.constant 0 : i32
    %2 = arith.minsi %1, %c0_i32 : i32
    %c0_i32_0 = arith.constant 0 : i32
    %c0_i32_1 = arith.constant 0 : i32
    return %2, %c0_i32_0 : i32, i32
  }
  func.func @transform_1(%arg0: i32, %arg1: i32) -> (i32, i32) {
    %c1_i32 = arith.constant 1 : i32
    %0 = arith.muli %arg0, %c1_i32 : i32
    %1 = arith.addi %0, %arg1 : i32
    %c0_i32 = arith.constant 0 : i32
    %2 = arith.minsi %1, %c0_i32 : i32
    %c0_i32_0 = arith.constant 0 : i32
    %c0_i32_1 = arith.constant 0 : i32
    return %2, %c0_i32_0 : i32, i32
  }
  func.func @transform_2(%arg0: i32, %arg1: i32) -> (i32, i32, i32) {
    %c0_i32 = arith.constant 0 : i32
    %c0_i32_0 = arith.constant 0 : i32
    %c0_i32_1 = arith.constant 0 : i32
    return %arg0, %c0_i32, %c0_i32_0 : i32, i32, i32
  }
}

</mosaic_0001>

<llo_original>
// kernel: tpu_custom_call.1
$region0: #{tpu_custom_call.1}
  #allocation0 [shape = 'u32[]', space=smem, size = 0x4, offset = 0x4, fixed_abs, tag = 'smem constant byte address 0x4 - core index']
  #allocation1 [shape = 'u32[72,128]{1,0:T(1,128)}', space=vmem, size = 0x9000, scoped, tag = 'internal scratch']
  #allocation2 [shape = 'f32[3,15]{1,0:T(4,128)}', space=vmem, size = 0x800, scoped, tag = 'scratch operand']
  %s0 = inlined_call_operand.vmem [shape: f32[8,32], index: 0, kind: input, shape index: {}]
  %s1 = inlined_call_operand.vmem [shape: s32[8,1], index: 1, kind: input, shape index: {}]
  %s2 = inlined_call_operand.vmem [shape: f32[1,3,15], index: 2, kind: output, shape index: {}]
  %s3 = sld [smem:[#allocation0]]
  $region26: #{tpu_custom_call.1} parent=0
    _
  %s5 = ssub.s32 1, %s3
  %s6 = scalar_select 0, %s5, %s3
  // Predicated region
  $region2: #{tpu_custom_call.1} parent=0 // pred_check
    _
  $region3: #{tpu_custom_call.1} parent=0 // pred_check_branch
    %8 = sbr.rel (0) target = $region5
  $region4: #{tpu_custom_call.1} parent=0 // pred_region
    %s9 = sadd.s32 0, 0
    %p10 = scmp.lt.s32.totalorder %s9, 0
    %s11 = scalar_select %p10, %s9, 0
    %p12 = scmp.lt.s32.totalorder %s11, 0
    %s13 = scalar_select %p12, %s11, 0
    %s14 = smul.addr %s13, 8
    %s15 = scalar_lea.vmem %s0, %s14
    %s16 = sadd.s32 0, 0
    %p17 = scmp.lt.s32.totalorder %s16, 0
    %s18 = scalar_select %p17, %s16, 0
  $region5: #{tpu_custom_call.1} parent=0 // pred_fallthru
    _
  // Predicated region
  $region6: #{tpu_custom_call.1} parent=0 // pred_check
    _
  $region7: #{tpu_custom_call.1} parent=0 // pred_check_branch
    %20 = sbr.rel (0) target = $region9
  $region8: #{tpu_custom_call.1} parent=0 // pred_region
    %s21 = sadd.s32 0, 0
    %p22 = scmp.lt.s32.totalorder %s21, 0
    %s23 = scalar_select %p22, %s21, 0
    %p24 = scmp.lt.s32.totalorder %s23, 0
    %s25 = scalar_select %p24, %s23, 0
    %s26 = smul.addr %s25, 8
    %s27 = scalar_lea.vmem %s1, %s26
    %s28 = sadd.s32 0, 0
    %p29 = scmp.lt.s32.totalorder %s28, 0
    %s30 = scalar_select %p29, %s28, 0
  $region9: #{tpu_custom_call.1} parent=0 // pred_fallthru
    _
  %s31 = sadd.s32 0, 0
  %p32 = scmp.lt.s32.totalorder %s31, 0
  %s33 = scalar_select %p32, %s31, 0
  %p34 = scmp.lt.s32.totalorder %s33, 0
  %s35 = scalar_select %p34, %s33, 0
  %s36 = smul.addr %s35, 8
  %s37 = scalar_lea.vmem %s0, %s36
  %s38 = sadd.s32 0, 0
  %p39 = scmp.lt.s32.totalorder %s38, 0
  %s40 = scalar_select %p39, %s38, 0
  %p41 = scmp.lt.s32.totalorder %s40, 0
  %s42 = scalar_select %p41, %s40, 0
  %s43 = smul.addr %s42, 8
  %s44 = scalar_lea.vmem %s1, %s43
  %s45 = sadd.s32 0, 0
  %p46 = scmp.lt.s32.totalorder %s45, 0
  %s47 = scalar_select %p46, %s45, 0
  %p48 = scmp.lt.s32.totalorder %s47, 0
  %s49 = scalar_select %p48, %s47, 0
  %s50 = smul.addr %s49, 8
  %s51 = scalar_lea.vmem %s0, %s50
  %s52 = sadd.s32 0, 0
  %p53 = scmp.lt.s32.totalorder %s52, 0
  %s54 = scalar_select %p53, %s52, 0
  %s55 = sadd.s32 0, 0
  %p56 = scmp.lt.s32.totalorder %s55, 0
  %s57 = scalar_select %p56, %s55, 0
  %p58 = scmp.lt.s32.totalorder %s57, 0
  %s59 = scalar_select %p58, %s57, 0
  %s60 = smul.addr %s59, 8
  %s61 = scalar_lea.vmem %s1, %s60
  %s62 = sadd.s32 0, 0
  %p63 = scmp.lt.s32.totalorder %s62, 0
  %s64 = scalar_select %p63, %s62, 0
  %p65 = scmp.eq.s32.totalorder 0, 0
  // Predicated region
  $region10: #{tpu_custom_call.1} parent=0 // pred_check
    %p66 = pneg %p65
  $region11: #{tpu_custom_call.1} parent=0 // pred_check_branch
    %68 = sbr.rel (%p66) target = $region13
  $region12: #{tpu_custom_call.1} parent=0 // pred_region
    %vm69 = vcmask 116736
    %70 = vst.msk [vmem:[#allocation2] sm:$0x7] %vm69, 0.0
  $region13: #{tpu_custom_call.1} parent=0 // pred_fallthru
    _
  %v71 = vld [vmem:[%s51] sm:$0xff]
  %v72 = vld [vmem:[%s61] sm:$0xff]
  %vm73 = vcmask 261120
  %v74 = vsel %vm73, %v71, -inf
  %75 = vmax.xlane.f32.xlu0 %v74
  %v76 = vpop.xlane.xlu0 %75
  %v77 = vsub.f32 %v71, %v76
  %v78 = vmul.f32 %v77, 1.442695
  %v79 = vpow.pop %v78
  %v80 = vsel %vm73, %v79, 0.0
  %81 = vadd.xlane.f32.xlu0 %v80
  %v82 = vpop.xlane.xlu0 %81
  %v83 = vrcp.pop %v82
  %v84 = vmul.f32 %v82, %v83
  %v85 = vsub.f32 1.0, %v84
  %v86 = vmul.f32 %v83, %v85
  %v87 = vadd.f32 %v83, %v86
  %vm88 = vweird.f32 %v82
  %vm89 = vweird.f32 %v83
  %vm90 = vmor %vm88, %vm89
  %v91 = vsel %vm90, %v83, %v87
  %v92 = vand.u32 2147483647, %v82
  %vm93 = vcmp.eq.f32.partialorder %v92, 8.507059e+37
  %v94 = vand.u32 %v82, 2147483648
  %v95 = vor.u32 1.1754944e-38, %v94
  %v96 = vsel %vm93, %v95, %v91
  %v97 = vlaneseq
  %v98 = vand.u32 %v97, 127
  %vm99 = vcmp.eq.f32.partialorder %v71, %v76
  %v100 = vsel %vm99, %v98, 32
  %v101 = vsel %vm73, %v100, 2147483647
  %v102 = vand.u32 %v101, 65535
  %v103 = vshra.s32 %v101, 16
  %v104 = vcvt.s32.f32 %v102
  %v105 = vcvt.s32.f32 %v103
  %106 = vmin.xlane.f32.xlu0 %v105
  %v107 = vpop.xlane.xlu0 %106
  %vm108 = vcmp.eq.f32.partialorder %v105, %v107
  %v109 = vsel %vm108, %v104, inf
  %110 = vmin.xlane.f32.xlu0 %v109
  %v111 = vpop.xlane.xlu0 %110
  %v112 = vcvt.f32.s32 %v111
  %v113 = vcvt.f32.s32 %v107
  %v114 = vshll.u32 %v113, 16
  %v115 = vadd.s32 %v114, %v112
  %vm116 = vcmp.eq.s32.totalorder %v115, %v72
  %s117 = sadd.s32 0, 0
  %p118 = scmp.lt.s32.totalorder %s117, 0
  %s119 = scalar_select %p118, %s117, 0
  %s120 = smul.u32 %s119, 8
  %v121 = vlaneseq
  %v122 = vshrl.u32 %v121, 7
  %v123 = vstv %s120
  %v124 = vadd.s32 %v122, %v123
  %vm125 = vcmp.lt.s32.totalorder %v124, 8
  %p126 = scmp.lt.s32.totalorder %s117, 1
  %s127 = scalar_select %p126, 1, 0
  %v128 = vstv %s127
  %vm129 = vcmp.eq.s32.totalorder %v128, 1
  %vm130 = vmand %vm125, %vm129
  %v131 = vsel %vm130, 1.0, 0.0
  %v132 = vsel %vm130, %v96, 0.0
  %vm133 = vmand %vm130, %vm116
  %v134 = vsel %vm133, 1.0, 0.0
  %v135 = vmul.f32 %v132, 15.0
  %v136 = vceil.f32 %v135
  %v137 = vcvt.f32.s32.to.zero.pseudo %v136
  %v138 = vsub.s32 %v137, 1
  %vm139 = vcmp.gt.s32.totalorder %v138, 0
  %v140 = vsel %vm139, %v138, 0
  %vm141 = vcmp.lt.s32.totalorder %v140, 14
  %v142 = vsel %vm141, %v140, 14
  %vm143 = vcmp.eq.s32.totalorder %v98, %v142
  %v144 = vsel %vm143, 1, 0
  %v145 = vcvt.s32.f32 %v144
  %vm146 = vcmp.eq.s32.totalorder %v98, 0
  %vm147 = vcmp.eq.s32.totalorder %v98, 1
  %149 = vset.pattern.permute.xlu0 0
  %150 = vperm.xlu0 %149, %v134
  %v151 = vpop.permute.xlu0 %150
  %v153 = vsel %vm147, %v132, %v151
  %v154 = vsel %vm146, %v131, %v153
  %155 = vxpose.xlu0.b32.start [1/16] %v154, 128
  %156 = vxpose.xlu0.b32.cont [2/16] 0.0, 128
  %157 = vxpose.xlu0.b32.cont [3/16] 0.0, 128
  %158 = vxpose.xlu0.b32.cont [4/16] 0.0, 128
  %159 = vxpose.xlu0.b32.cont [5/16] 0.0, 128
  %160 = vxpose.xlu0.b32.cont [6/16] 0.0, 128
  %161 = vxpose.xlu0.b32.cont [7/16] 0.0, 128
  %162 = vxpose.xlu0.b32.cont [8/16] 0.0, 128
  %163 = vxpose.xlu0.b32.cont [9/16] 0.0, 128
  %164 = vxpose.xlu0.b32.cont [10/16] 0.0, 128
  %165 = vxpose.xlu0.b32.cont [11/16] 0.0, 128
  %166 = vxpose.xlu0.b32.cont [12/16] 0.0, 128
  %167 = vxpose.xlu0.b32.cont [13/16] 0.0, 128
  %168 = vxpose.xlu0.b32.cont [14/16] 0.0, 128
  %169 = vxpose.xlu0.b32.cont [15/16] 0.0, 128
  %170 = vxpose.xlu0.b32.end [16/16] 0.0, 128
  %v171 = vpop.trf.xlu0
  %v172 = vpop.trf.xlu0
  %v173 = vpop.trf.xlu0
  %v174 = vpop.trf.xlu0
  %v175 = vpop.trf.xlu0
  %v176 = vpop.trf.xlu0
  %v177 = vpop.trf.xlu0
  %v178 = vpop.trf.xlu0
  %v179 = vpop.trf.xlu0
  %v180 = vpop.trf.xlu0
  %v181 = vpop.trf.xlu0
  %v182 = vpop.trf.xlu0
  %v183 = vpop.trf.xlu0
  %v184 = vpop.trf.xlu0
  %v185 = vpop.trf.xlu0
  %v186 = vpop.trf.xlu0
  %vm187 = vcmask 64512
  %v189 = vsel %vm187, %v171, 0
  %191 = vmatpush.msra.mxu0 0.0
  %192 = vmatpush.msra.mxu0 0.0
  %193 = vmatpush.msra.mxu0 0.0
  %194 = vmatpush.msra.mxu0 0.0
  %195 = vmatpush.msra.mxu0 0.0
  %196 = vmatpush.msra.mxu0 0.0
  %197 = vmatpush.msra.mxu0 0.0
  %198 = vmatpush.msra.mxu0 0.0
  %199 = vmatpush.msra.mxu0 0.0
  %200 = vmatpush.msra.mxu0 0.0
  %201 = vmatpush.msra.mxu0 0.0
  %202 = vmatpush.msra.mxu0 0.0
  %203 = vmatpush.msra.mxu0 0.0
  %204 = vmatpush.msra.mxu0 0.0
  %205 = vmatpush.msra.mxu0 0.0
  %206 = vmatpush.msra.mxu0 %v145
  %207 = vmatmul.f32.gmra.mxu0 %v189
  %v208 = vpop.f32.mrf.mxu0
  %v209 = vadd.f32 0.0, %v208
  %210 = vdwg.mxu0
  %v211 = vld [vmem:[#allocation2] sm:$0x7]
  %v212 = vadd.f32 %v211, %v209
  %vm213 = vcmask 116736
  %214 = vst.msk [vmem:[#allocation2] sm:$0x7] %vm213, %v212
  // Predicated region
  $region14: #{tpu_custom_call.1} parent=0 // pred_check
    %p215 = pneg %p65
  $region15: #{tpu_custom_call.1} parent=0 // pred_check_branch
    %217 = sbr.rel (%p215) target = $region17
  $region16: #{tpu_custom_call.1} parent=0 // pred_region
    %v218 = vld [vmem:[#allocation2] sm:$0x7]
    %219 = vst.msk [vmem:[%s2] sm:$0x7] %vm213, %v218
  $region17: #{tpu_custom_call.1} parent=0 // pred_fallthru
    _
  // Predicated region
  $region18: #{tpu_custom_call.1} parent=0 // pred_check
    _
  $region19: #{tpu_custom_call.1} parent=0 // pred_check_branch
    %221 = sbr.rel (0) target = $region21
  $region20: #{tpu_custom_call.1} parent=0 // pred_region
    _
  $region21: #{tpu_custom_call.1} parent=0 // pred_fallthru
    _
  // Predicated region
  $region22: #{tpu_custom_call.1} parent=0 // pred_check
    _
  $region23: #{tpu_custom_call.1} parent=0 // pred_check_branch
    %223 = sbr.rel (0) target = $region25
  $region24: #{tpu_custom_call.1} parent=0 // pred_region
    _
  $region25: #{tpu_custom_call.1} parent=0 // pred_fallthru
    _

</llo_original>
